<compile_context>
chip_gen: v7x
topology: tpu7x:2x2x1
jax: 0.10.0
libtpu: 0.0.40
codegen_flags: <defaults>
</compile_context>

<pallas_src>
import functools

import jax
import jax.numpy as jnp
from jax.experimental import pallas as pl
from jax.experimental.pallas import tpu as pltpu


# --------------------------------------------------------------------------------------
# Pallas kernel: folded-norm 1x1-conv backbone (ReLU) + fused [cls|box] 1x1 head,
# transposed layout (channels on sublanes, pixels on lanes).
# --------------------------------------------------------------------------------------
def _dense_detector_kernel(x_ref, wbT_ref, bbT_ref, whT_ref, bhT_ref, *out_refs,
                           want_features):
    # x_ref: (C, tm) -- raw NCHW pixels, channels on sublanes, pixels on lanes.
    x = x_ref[...]
    # backbone 1x1 conv with (x - mean)/std folded into wbT/bbT, then ReLU
    feat = jnp.dot(wbT_ref[...], x, preferred_element_type=jnp.float32) + bbT_ref[...]
    feat = jnp.maximum(feat, 0.0)
    # fused [cls | box] 1x1 head: one MXU call, one lane-dense output slab
    head = jnp.dot(whT_ref[...], feat, preferred_element_type=jnp.float32) + bhT_ref[...]
    if want_features:
        feat_ref, head_ref = out_refs
        feat_ref[...] = feat.astype(feat_ref.dtype)
    else:
        (head_ref,) = out_refs
    head_ref[...] = head.astype(head_ref.dtype)


def dense_detector_pallas(x_nc_hw, wb, bb, wh, bh, *, tm=2048,
                          feat_dtype=jnp.bfloat16, head_dtype=jnp.float32,
                          want_features=True):
    """x_nc_hw: (N, C, H*W) raw NCHW pixels; wb/bb backbone weights (norm folded);
    wh/bh fused [cls|box] head. Returns (feat (N,Cb,HW) or None, head (N,Ch,HW))."""
    N, C, HW = x_nc_hw.shape
    Cb = wb.shape[1]
    Ch = wh.shape[1]

    # transposed weights (output channels on sublanes) -- trace-time, tiny matrices
    wbT = wb.T                      # (Cb, C)
    bbT = bb.reshape(1, Cb).T       # (Cb, 1)
    whT = wh.T                      # (Ch, Cb)
    bhT = bh.reshape(1, Ch).T       # (Ch, 1)

    # lane-axis tile (pixels per image per step): full extent if it fits, else a
    # multiple of 128; partial tail blocks are handled by Pallas (no jnp.pad).
    if HW <= tm:
        tm_eff = HW
    else:
        tm_eff = max(128, (min(tm, HW) // 128) * 128)
    n_hw = pl.cdiv(HW, tm_eff)

    img_map = lambda n, j: (n, 0, j)
    const_map = lambda n, j: (0, 0)          # weights/biases stay resident in VMEM

    out_shape = []
    out_specs = []
    if want_features:
        out_shape.append(jax.ShapeDtypeStruct((N, Cb, HW), feat_dtype))
        out_specs.append(pl.BlockSpec((None, Cb, tm_eff), img_map))
    out_shape.append(jax.ShapeDtypeStruct((N, Ch, HW), head_dtype))
    out_specs.append(pl.BlockSpec((None, Ch, tm_eff), img_map))

    n_pix = N * HW
    bytes_accessed = (
        n_pix * C * x_nc_hw.dtype.itemsize
        + (n_pix * Cb * jnp.dtype(feat_dtype).itemsize if want_features else 0)
        + n_pix * Ch * jnp.dtype(head_dtype).itemsize
        + 4 * (Cb * C + Cb + Ch * Cb + Ch))
    flops = 2 * n_pix * (C * Cb + Cb * Ch)

    outs = pl.pallas_call(
        functools.partial(_dense_detector_kernel, want_features=want_features),
        out_shape=tuple(out_shape),
        grid_spec=pl.GridSpec(
            grid=(N, n_hw),
            in_specs=[
                pl.BlockSpec((None, C, tm_eff), img_map),   # NCHW pixels, lane-dense
                pl.BlockSpec((Cb, C), const_map),           # backbone weight^T (norm folded)
                pl.BlockSpec((Cb, 1), const_map),           # backbone bias^T
                pl.BlockSpec((Ch, Cb), const_map),          # fused head weight^T [wc|wr]^T
                pl.BlockSpec((Ch, 1), const_map),           # fused head bias^T
            ],
            out_specs=tuple(out_specs),
        ),
        compiler_params=pltpu.CompilerParams(
            dimension_semantics=("parallel", "parallel")),
        cost_estimate=pl.CostEstimate(
            flops=flops, transcendentals=0, bytes_accessed=bytes_accessed),
    )(x_nc_hw, wbT, bbT, whT, bhT)

    if want_features:
        feat, head = outs
        return feat, head
    (head,) = outs
    return None, head


# --------------------------------------------------------------------------------------
# Glue reproducing the module semantics
# --------------------------------------------------------------------------------------
def permute_to_N_HWA_K(tensor, K):
    """(N, Ai*K, H, W) -> (N, H*W*Ai, K), exact port of the PyTorch helper (used by ref)."""
    assert tensor.ndim == 4, tensor.shape
    N, _, H, W = tensor.shape
    t = tensor.reshape(N, -1, K, H, W)
    t = jnp.transpose(t, (0, 3, 4, 1, 2))
    return t.reshape(N, -1, K)


def dense_detector_forward(images_nchw, params, *, num_classes, num_anchors,
                           feat_dtype=jnp.bfloat16, head_dtype=jnp.float32):
    """Forward pass: preprocess -> backbone -> head -> _transpose_dense_predictions."""
    N, C, H, W = images_nchw.shape
    HW = H * W
    Cb = params["wb"].shape[1]
    A, K = num_anchors, num_classes
    AK = A * K

    # Fold preprocess_image's (x - mean) / std into the backbone 1x1 conv (trace time).
    mean, std = params["pixel_mean"], params["pixel_std"]          # (1, C) each
    inv_std = 1.0 / std
    wb_folded = params["wb"] * inv_std.reshape(-1, 1)               # scale rows
    bb_folded = params["bb"] - (mean * inv_std) @ params["wb"]

    # Fuse cls / box heads column-wise -> one output stream, one MXU call.
    # Column ordering stays anchor-major (cls: a*K + k, box: a*4 + d), matching
    # permute_to_N_HWA_K semantics.
    wh = jnp.concatenate([params["wc"], params["wr"]], axis=1)
    bh = jnp.concatenate([params["bc"], params["br"]], axis=1)

    # NCHW goes straight into the kernel: free reshape, no HBM transpose.
    x = images_nchw.reshape(N, C, HW)

    feat, head = dense_detector_pallas(
        x, wb_folded, bb_folded, wh, bh,
        feat_dtype=feat_dtype, head_dtype=head_dtype, want_features=True)

    # backbone feature map is already channels-first: plain reshape to NCHW
    feat_nchw = feat.reshape(N, Cb, H, W)

    # _transpose_dense_predictions([[cls], [box]], [num_classes, 4]) on the channels-first
    # head output: only this small 24-channel tensor needs a permute.
    cls_pred = (head[:, :AK, :].reshape(N, A, K, HW)
                .transpose(0, 3, 1, 2).reshape(N, HW * A, K))
    box_pred = (head[:, AK:, :].reshape(N, A, 4, HW)
                .transpose(0, 3, 1, 2).reshape(N, HW * A, 4))
    predictions = [[cls_pred], [box_pred]]

    # TODO(synk): ImageList padding to size_divisibility, forward_training losses and
    # per-image inference decoding/NMS (forward_inference) are abstract / data-dependent
    # and are not implemented here.
    return [feat_nchw], predictions


# --------------------------------------------------------------------------------------
def _reference_forward(images_nchw, params, *, num_classes, num_anchors):
    """Pure-JAX reference following the PyTorch module literally (incl. NCHW round-trips)."""
    N, C, H, W = images_nchw.shape
    x = jnp.transpose(images_nchw, (0, 2, 3, 1)).reshape(N * H * W, C)
    norm = (x - params["pixel_mean"]) / params["pixel_std"]
    feat = jnp.maximum(norm @ params["wb"] + params["bb"], 0.0)
    cls = feat @ params["wc"] + params["bc"]
    box = feat @ params["wr"] + params["br"]
    Cb = params["wb"].shape[1]
    feat_nchw = feat.reshape(N, H, W, Cb).transpose(0, 3, 1, 2)
    cls_nchw = cls.reshape(N, H, W, num_anchors * num_classes).transpose(0, 3, 1, 2)
    box_nchw = box.reshape(N, H, W, num_anchors * 4).transpose(0, 3, 1, 2)
    return [feat_nchw], [
        [permute_to_N_HWA_K(cls_nchw, num_classes)],
        [permute_to_N_HWA_K(box_nchw, 4)],
    ]


if __name__ == "__main__":
    # small synthetic shapes consistent with the module's forward
    N, C, H, W = 2, 3, 16, 16          # batch of 2 CHW images (BGR)
    CB = 32                            # backbone feature channels
    A = 2                              # anchors per location
    K = 8                              # classes per anchor

    key = jax.random.PRNGKey(0)
    k_img, k_wb, k_bb, k_wc, k_bc, k_wr, k_br = jax.random.split(key, 7)

    # "batched_inputs": images in (C, H, W), pixel values in [0, 255]
    images = jax.random.uniform(k_img, (N, C, H, W), jnp.float32, 0.0, 255.0)

    params = {
        # registered buffers of DenseDetector (BGR ImageNet mean/std), broadcast as (1, C)
        "pixel_mean": jnp.array([[103.53, 116.28, 123.675]], jnp.float32),
        "pixel_std": jnp.array([[57.375, 57.120, 58.395]], jnp.float32),
        # synthetic backbone: single 1x1 conv + ReLU
        "wb": jax.random.normal(k_wb, (C, CB), jnp.float32) * 0.05,
        "bb": jax.random.normal(k_bb, (1, CB), jnp.float32) * 0.05,
        # synthetic head: cls (A*K channels) and box (A*4 channels) 1x1 convs
        "wc": jax.random.normal(k_wc, (CB, A * K), jnp.float32) * 0.05,
        "bc": jax.random.normal(k_bc, (1, A * K), jnp.float32) * 0.05,
        "wr": jax.random.normal(k_wr, (CB, A * 4), jnp.float32) * 0.05,
        "br": jax.random.normal(k_br, (1, A * 4), jnp.float32) * 0.05,
    }

    fwd = jax.jit(functools.partial(dense_detector_forward, num_classes=K, num_anchors=A))
    feats, preds = jax.block_until_ready(fwd(images, params))

    # shape checks: (N, Hi*Wi*Ai, K) and (N, Hi*Wi*Ai, 4), features in NCHW
    assert preds[0][0].shape == (N, H * W * A, K), preds[0][0].shape
    assert preds[1][0].shape == (N, H * W * A, 4), preds[1][0].shape
    assert feats[0].shape == (N, CB, H, W), feats[0].shape
    assert feats[0].dtype == jnp.bfloat16, feats[0].dtype

    # numerical check against pure-JAX reference (literal PyTorch-style path)
    ref_feats, ref_preds = _reference_forward(images, params, num_classes=K, num_anchors=A)
    # backbone features written as bf16 -> compare at bf16 precision
    assert jnp.allclose(feats[0].astype(jnp.float32), ref_feats[0], atol=3e-2, rtol=3e-2)
    # head (cls/box) kept in f32
    assert jnp.allclose(preds[0][0], ref_preds[0][0], atol=2e-3, rtol=2e-3)
    assert jnp.allclose(preds[1][0], ref_preds[1][0], atol=2e-3, rtol=2e-3)

    print("KERNEL_OK")
</pallas_src>

<mosaic_0001>
module attributes {stable_mosaic.version = 11 : i64} {
  func.func @_dense_detector_kernel(%arg0: i32, %arg1: i32, %arg2: memref<1x3x256xf32, #tpu.memory_space<vmem>>, %arg3: memref<32x3xf32, #tpu.memory_space<vmem>>, %arg4: memref<32x1xf32, #tpu.memory_space<vmem>>, %arg5: memref<24x32xf32, #tpu.memory_space<vmem>>, %arg6: memref<24x1xf32, #tpu.memory_space<vmem>>, %arg7: memref<1x32x256xbf16, #tpu.memory_space<vmem>>, %arg8: memref<1x24x256xf32, #tpu.memory_space<vmem>>) attributes {dimension_semantics = [#tpu.dimension_semantics<parallel>, #tpu.dimension_semantics<parallel>], iteration_bounds = array<i64: 2, 1>, scalar_prefetch = 0 : i64, scratch_operands = 0 : i64, tpu.core_type = #tpu.core_type<tc>, window_params = [{transform_indices = @transform_0, window_bounds = array<i64: 1, 3, 256>}, {pipeline_mode = #tpu.pipeline_mode<synchronous>, transform_indices = @transform_1, window_bounds = array<i64: 32, 3>}, {pipeline_mode = #tpu.pipeline_mode<synchronous>, transform_indices = @transform_2, window_bounds = array<i64: 32, 1>}, {pipeline_mode = #tpu.pipeline_mode<synchronous>, transform_indices = @transform_3, window_bounds = array<i64: 24, 32>}, {pipeline_mode = #tpu.pipeline_mode<synchronous>, transform_indices = @transform_4, window_bounds = array<i64: 24, 1>}, {transform_indices = @transform_5, window_bounds = array<i64: 1, 32, 256>}, {transform_indices = @transform_6, window_bounds = array<i64: 1, 24, 256>}]} {
    %c0 = arith.constant 0 : index
    %c0_0 = arith.constant 0 : index
    %c0_1 = arith.constant 0 : index
    %0 = vector.load %arg2[%c0, %c0_0, %c0_1] : memref<1x3x256xf32, #tpu.memory_space<vmem>>, vector<1x3x256xf32>
    %1 = vector.shape_cast %0 : vector<1x3x256xf32> to vector<3x256xf32>
    %c0_2 = arith.constant 0 : index
    %c0_3 = arith.constant 0 : index
    %2 = vector.load %arg3[%c0_2, %c0_3] : memref<32x3xf32, #tpu.memory_space<vmem>>, vector<32x3xf32>
    %cst = arith.constant dense<0.000000e+00> : vector<32x256xf32>
    %3 = tpu.matmul %2, %1, %cst {dimension_numbers = #tpu.dot_dimension_numbers<[1], [0], [0], [1], [0, 0, 1, 1], [], []>} : vector<32x3xf32>, vector<3x256xf32>, vector<32x256xf32> -> vector<32x256xf32>
    %c0_4 = arith.constant 0 : index
    %c0_5 = arith.constant 0 : index
    %4 = vector.load %arg4[%c0_4, %c0_5] : memref<32x1xf32, #tpu.memory_space<vmem>>, vector<32x1xf32>
    %5 = vector.broadcast %4 : vector<32x1xf32> to vector<32x256xf32>
    %6 = arith.addf %3, %5 : vector<32x256xf32>
    %cst_6 = arith.constant 0.000000e+00 : f32
    %7 = vector.broadcast %cst_6 : f32 to vector<32x256xf32>
    %8 = arith.maximumf %6, %7 : vector<32x256xf32>
    %c0_7 = arith.constant 0 : index
    %c0_8 = arith.constant 0 : index
    %9 = vector.load %arg5[%c0_7, %c0_8] : memref<24x32xf32, #tpu.memory_space<vmem>>, vector<24x32xf32>
    %cst_9 = arith.constant dense<0.000000e+00> : vector<24x256xf32>
    %10 = tpu.matmul %9, %8, %cst_9 {dimension_numbers = #tpu.dot_dimension_numbers<[1], [0], [0], [1], [0, 0, 1, 1], [], []>} : vector<24x32xf32>, vector<32x256xf32>, vector<24x256xf32> -> vector<24x256xf32>
    %c0_10 = arith.constant 0 : index
    %c0_11 = arith.constant 0 : index
    %11 = vector.load %arg6[%c0_10, %c0_11] : memref<24x1xf32, #tpu.memory_space<vmem>>, vector<24x1xf32>
    %12 = vector.broadcast %11 : vector<24x1xf32> to vector<24x256xf32>
    %13 = arith.addf %10, %12 : vector<24x256xf32>
    %14 = arith.truncf %8 : vector<32x256xf32> to vector<32x256xbf16>
    %c0_12 = arith.constant 0 : index
    %c0_13 = arith.constant 0 : index
    %c0_14 = arith.constant 0 : index
    %15 = vector.load %arg7[%c0_12, %c0_13, %c0_14] : memref<1x32x256xbf16, #tpu.memory_space<vmem>>, vector<1x32x256xbf16>
    %16 = vector.shape_cast %15 : vector<1x32x256xbf16> to vector<32x256xbf16>
    %17 = vector.shape_cast %14 : vector<32x256xbf16> to vector<1x32x256xbf16>
    tpu.vector_store %arg7[%c0_12, %c0_13, %c0_14], %17 {strides = array<i32>} : memref<1x32x256xbf16, #tpu.memory_space<vmem>>, vector<1x32x256xbf16>,
    %c0_15 = arith.constant 0 : index
    %c0_16 = arith.constant 0 : index
    %c0_17 = arith.constant 0 : index
    %18 = vector.load %arg8[%c0_15, %c0_16, %c0_17] : memref<1x24x256xf32, #tpu.memory_space<vmem>>, vector<1x24x256xf32>
    %19 = vector.shape_cast %18 : vector<1x24x256xf32> to vector<24x256xf32>
    %20 = vector.shape_cast %13 : vector<24x256xf32> to vector<1x24x256xf32>
    tpu.vector_store %arg8[%c0_15, %c0_16, %c0_17], %20 {strides = array<i32>} : memref<1x24x256xf32, #tpu.memory_space<vmem>>, vector<1x24x256xf32>,
    return
  }
  func.func @transform_0(%arg0: i32, %arg1: i32) -> (i32, i32, i32) {
    %c0_i32 = arith.constant 0 : i32
    %c0_i32_0 = arith.constant 0 : i32
    return %arg0, %c0_i32, %arg1 : i32, i32, i32
  }
  func.func @transform_1(%arg0: i32, %arg1: i32) -> (i32, i32) {
    %c0_i32 = arith.constant 0 : i32
    %c0_i32_0 = arith.constant 0 : i32
    %c0_i32_1 = arith.constant 0 : i32
    return %c0_i32, %c0_i32_0 : i32, i32
  }
  func.func @transform_2(%arg0: i32, %arg1: i32) -> (i32, i32) {
    %c0_i32 = arith.constant 0 : i32
    %c0_i32_0 = arith.constant 0 : i32
    %c0_i32_1 = arith.constant 0 : i32
    return %c0_i32, %c0_i32_0 : i32, i32
  }
  func.func @transform_3(%arg0: i32, %arg1: i32) -> (i32, i32) {
    %c0_i32 = arith.constant 0 : i32
    %c0_i32_0 = arith.constant 0 : i32
    %c0_i32_1 = arith.constant 0 : i32
    return %c0_i32, %c0_i32_0 : i32, i32
  }
  func.func @transform_4(%arg0: i32, %arg1: i32) -> (i32, i32) {
    %c0_i32 = arith.constant 0 : i32
    %c0_i32_0 = arith.constant 0 : i32
    %c0_i32_1 = arith.constant 0 : i32
    return %c0_i32, %c0_i32_0 : i32, i32
  }
  func.func @transform_5(%arg0: i32, %arg1: i32) -> (i32, i32, i32) {
    %c0_i32 = arith.constant 0 : i32
    %c0_i32_0 = arith.constant 0 : i32
    return %arg0, %c0_i32, %arg1 : i32, i32, i32
  }
  func.func @transform_6(%arg0: i32, %arg1: i32) -> (i32, i32, i32) {
    %c0_i32 = arith.constant 0 : i32
    %c0_i32_0 = arith.constant 0 : i32
    return %arg0, %c0_i32, %arg1 : i32, i32, i32
  }
}

</mosaic_0001>

<llo_original>
// kernel: dense_detector_forward.1
$region0: #{dense_detector_forward.1}
  #allocation0 [shape = 'u32[]', space=smem, size = 0x4, offset = 0x4, fixed_abs, tag = 'smem constant byte address 0x4 - core index']
  #allocation1 [shape = 'u32[144,128]{1,0:T(1,128)}', space=vmem, size = 0x12000, scoped, tag = 'internal scratch']
  %s0 = inlined_call_operand.vmem [shape: f32[2,3,256], index: 0, kind: input, shape index: {}]
  %s1 = inlined_call_operand.vmem [shape: f32[32,3], index: 1, kind: input, shape index: {}]
  %s2 = inlined_call_operand.vmem [shape: f32[32,1], index: 2, kind: input, shape index: {}]
  %s3 = inlined_call_operand.vmem [shape: f32[24,32], index: 3, kind: input, shape index: {}]
  %s4 = inlined_call_operand.vmem [shape: f32[24,1], index: 4, kind: input, shape index: {}]
  %s5 = inlined_call_operand.vmem [shape: bf16[2,32,256], index: 5, kind: output, shape index: {0}]
  %s6 = inlined_call_operand.vmem [shape: f32[2,24,256], index: 6, kind: output, shape index: {1}]
  %7 = xla_tuple %s5, %s6
  %s8 = sld [smem:[#allocation0]]
  $region61: #{dense_detector_forward.1} parent=0
    _
  %s10 = ssub.s32 1, %s8
  %s11 = scalar_select 0, %s10, %s8
  loop: start=0, step=1, limit=4
  $region2: #{dense_detector_forward.1} parent=0 // loop_pre_header
    _
  $region3: #{dense_detector_forward.1} parent=0 // loop_header
    %s13 = sphi 0, %s17
    %p14 = scmp.ge.s32.totalorder %s13, 4
    %s20 = sphi 0, %s32
    %s21 = sphi 0, %s28
    %s22 = sphi 0, %s20
    %s23 = sphi 0, %s21
    %s24 = sphi 0, %s22
    %s25 = sphi 0, %s23
    %s37 = sphi 0, %s39
    %s40 = sphi 0, %s37
    %s41 = sphi 0, %s40
    %s57 = sphi 0, %s41
    %s61 = sphi 0, %s61
    %s63 = sphi 0, %s61
    %s64 = sphi 0, %s63
    %s78 = sphi 0, %s64
    %s82 = sphi 0, %s82
    %s84 = sphi 0, %s82
    %s85 = sphi 0, %s84
    %s99 = sphi 0, %s85
    %s103 = sphi 0, %s103
    %s105 = sphi 0, %s103
    %s106 = sphi 0, %s105
    %s120 = sphi 0, %s106
    %s124 = sphi 0, %s124
    %s126 = sphi 0, %s124
    %s127 = sphi 0, %s126
    %s141 = sphi 0, %s127
    %s149 = sphi 0, %s151
    %s152 = sphi 0, %s149
    %s153 = sphi 0, %s152
    %s169 = sphi 0, %s153
    %s177 = sphi 0, %s179
    %s180 = sphi 0, %s177
    %s181 = sphi 0, %s180
    %s197 = sphi 0, %s181
  $region4: #{dense_detector_forward.1} parent=0 // loop_header_branch
    %16 = sbr.rel (%p14) target = $region8
  $region5: #{dense_detector_forward.1} parent=0 // loop_body
    %s18 = ssub.s32 %s13, 1
    %s19 = ssub.s32 %s13, 2
    %s26 = sadd.s32 1, %s21
    %p27 = scmp.ge.s32.totalorder %s26, 1
    %s28 = scalar_select %p27, 0, %s26
    %s29 = sadd.s32 1, %s20
    %s30 = scalar_select %p27, %s29, %s20
    %p31 = scmp.ge.s32.totalorder %s30, 2
    %s32 = scalar_select %p31, 0, %s30
    %s33 = ssub.s32 %s20, %s32
    %s34 = ssub.s32 %s21, %s28
    %s35 = sor.u32 %s33, %s34
    %p36 = scmp.eq.s32.totalorder %s35, 0
    %s38 = sadd.s32 %s37, 1
    %s39 = scalar_select %p36, %s37, %s38
    %p42 = pneg %p36
    %p43 = scmp.eq.s32.totalorder %s13, 1
    %p44 = por %p42, %p43
    %p45 = scmp.ne.s32.totalorder %s37, %s40
    %p46 = scmp.eq.s32.totalorder %s13, 0
    %p47 = por %p45, %p46
    %p48 = scmp.ne.s32.totalorder %s37, %s40
    %p49 = scmp.eq.s32.totalorder %s18, 1
    %p50 = por %p48, %p49
    %p51 = scmp.ne.s32.totalorder %s40, %s41
    %p52 = scmp.eq.s32.totalorder %s18, 0
    %p53 = por %p51, %p52
    %p54 = scmp.ne.s32.totalorder %s40, %s41
    %p55 = scmp.eq.s32.totalorder %s19, 1
    %p56 = por %p54, %p55
    %p58 = scmp.ne.s32.totalorder %s41, %s57
    %p59 = scmp.eq.s32.totalorder %s19, 0
    %p60 = por %p58, %p59
    %s62 = sadd.s32 %s61, 1
    %p65 = scmp.eq.s32.totalorder %s13, 1
    %p66 = scmp.ne.s32.totalorder %s61, %s63
    %p67 = scmp.eq.s32.totalorder %s13, 0
    %p68 = por %p66, %p67
    %p69 = scmp.ne.s32.totalorder %s61, %s63
    %p70 = scmp.eq.s32.totalorder %s18, 1
    %p71 = por %p69, %p70
    %p72 = scmp.ne.s32.totalorder %s63, %s64
    %p73 = scmp.eq.s32.totalorder %s18, 0
    %p74 = por %p72, %p73
    %p75 = scmp.ne.s32.totalorder %s63, %s64
    %p76 = scmp.eq.s32.totalorder %s19, 1
    %p77 = por %p75, %p76
    %p79 = scmp.ne.s32.totalorder %s64, %s78
    %p80 = scmp.eq.s32.totalorder %s19, 0
    %p81 = por %p79, %p80
    %s83 = sadd.s32 %s82, 1
    %p86 = scmp.eq.s32.totalorder %s13, 1
    %p87 = scmp.ne.s32.totalorder %s82, %s84
    %p88 = scmp.eq.s32.totalorder %s13, 0
    %p89 = por %p87, %p88
    %p90 = scmp.ne.s32.totalorder %s82, %s84
    %p91 = scmp.eq.s32.totalorder %s18, 1
    %p92 = por %p90, %p91
    %p93 = scmp.ne.s32.totalorder %s84, %s85
    %p94 = scmp.eq.s32.totalorder %s18, 0
    %p95 = por %p93, %p94
    %p96 = scmp.ne.s32.totalorder %s84, %s85
    %p97 = scmp.eq.s32.totalorder %s19, 1
    %p98 = por %p96, %p97
    %p100 = scmp.ne.s32.totalorder %s85, %s99
    %p101 = scmp.eq.s32.totalorder %s19, 0
    %p102 = por %p100, %p101
    %s104 = sadd.s32 %s103, 1
    %p107 = scmp.eq.s32.totalorder %s13, 1
    %p108 = scmp.ne.s32.totalorder %s103, %s105
    %p109 = scmp.eq.s32.totalorder %s13, 0
    %p110 = por %p108, %p109
    %p111 = scmp.ne.s32.totalorder %s103, %s105
    %p112 = scmp.eq.s32.totalorder %s18, 1
    %p113 = por %p111, %p112
    %p114 = scmp.ne.s32.totalorder %s105, %s106
    %p115 = scmp.eq.s32.totalorder %s18, 0
    %p116 = por %p114, %p115
    %p117 = scmp.ne.s32.totalorder %s105, %s106
    %p118 = scmp.eq.s32.totalorder %s19, 1
    %p119 = por %p117, %p118
    %p121 = scmp.ne.s32.totalorder %s106, %s120
    %p122 = scmp.eq.s32.totalorder %s19, 0
    %p123 = por %p121, %p122
    %s125 = sadd.s32 %s124, 1
    %p128 = scmp.eq.s32.totalorder %s13, 1
    %p129 = scmp.ne.s32.totalorder %s124, %s126
    %p130 = scmp.eq.s32.totalorder %s13, 0
    %p131 = por %p129, %p130
    %p132 = scmp.ne.s32.totalorder %s124, %s126
    %p133 = scmp.eq.s32.totalorder %s18, 1
    %p134 = por %p132, %p133
    %p135 = scmp.ne.s32.totalorder %s126, %s127
    %p136 = scmp.eq.s32.totalorder %s18, 0
    %p137 = por %p135, %p136
    %p138 = scmp.ne.s32.totalorder %s126, %s127
    %p139 = scmp.eq.s32.totalorder %s19, 1
    %p140 = por %p138, %p139
    %p142 = scmp.ne.s32.totalorder %s127, %s141
    %p143 = scmp.eq.s32.totalorder %s19, 0
    %p144 = por %p142, %p143
    %s145 = ssub.s32 %s20, %s32
    %s146 = ssub.s32 %s21, %s28
    %s147 = sor.u32 %s145, %s146
    %p148 = scmp.eq.s32.totalorder %s147, 0
    %s150 = sadd.s32 %s149, 1
    %s151 = scalar_select %p148, %s149, %s150
    %p154 = pneg %p148
    %p155 = scmp.eq.s32.totalorder %s13, 1
    %p156 = por %p154, %p155
    %p157 = scmp.ne.s32.totalorder %s149, %s152
    %p158 = scmp.eq.s32.totalorder %s13, 0
    %p159 = por %p157, %p158
    %p160 = scmp.ne.s32.totalorder %s149, %s152
    %p161 = scmp.eq.s32.totalorder %s18, 1
    %p162 = por %p160, %p161
    %p163 = scmp.ne.s32.totalorder %s152, %s153
    %p164 = scmp.eq.s32.totalorder %s18, 0
    %p165 = por %p163, %p164
    %p166 = scmp.ne.s32.totalorder %s152, %s153
    %p167 = scmp.eq.s32.totalorder %s19, 1
    %p168 = por %p166, %p167
    %p170 = scmp.ne.s32.totalorder %s153, %s169
    %p171 = scmp.eq.s32.totalorder %s19, 0
    %p172 = por %p170, %p171
    %s173 = ssub.s32 %s20, %s32
    %s174 = ssub.s32 %s21, %s28
    %s175 = sor.u32 %s173, %s174
    %p176 = scmp.eq.s32.totalorder %s175, 0
    %s178 = sadd.s32 %s177, 1
    %s179 = scalar_select %p176, %s177, %s178
    %p182 = pneg %p176
    %p183 = scmp.eq.s32.totalorder %s13, 1
    %p184 = por %p182, %p183
    %p185 = scmp.ne.s32.totalorder %s177, %s180
    %p186 = scmp.eq.s32.totalorder %s13, 0
    %p187 = por %p185, %p186
    %p188 = scmp.ne.s32.totalorder %s177, %s180
    %p189 = scmp.eq.s32.totalorder %s18, 1
    %p190 = por %p188, %p189
    %p191 = scmp.ne.s32.totalorder %s180, %s181
    %p192 = scmp.eq.s32.totalorder %s18, 0
    %p193 = por %p191, %p192
    %p194 = scmp.ne.s32.totalorder %s180, %s181
    %p195 = scmp.eq.s32.totalorder %s19, 1
    %p196 = por %p194, %p195
    %p198 = scmp.ne.s32.totalorder %s181, %s197
    %p199 = scmp.eq.s32.totalorder %s19, 0
    %p200 = por %p198, %p199
    %p201 = scmp.le.s32.totalorder 1, %s13
    %p202 = scmp.lt.s32.totalorder %s13, 3
    %p203 = pnand %p201, %p202
    %p204 = pneg %p203
    // Predicated region
    $region9: #{dense_detector_forward.1} parent=5 // pred_check
      _
    $region10: #{dense_detector_forward.1} parent=5 // pred_check_branch
      %206 = sbr.rel (%p203) target = $region12
    $region11: #{dense_detector_forward.1} parent=5 // pred_region
      %s207 = ssub.s32 %s13, 1
      // Predicated region
      $region13: #{dense_detector_forward.1} parent=11 // pred_check
        %p208 = pneg %p74
      $region14: #{dense_detector_forward.1} parent=11 // pred_check_branch
        %210 = sbr.rel (%p208) target = $region16
      $region15: #{dense_detector_forward.1} parent=11 // pred_region
        _
      $region16: #{dense_detector_forward.1} parent=11 // pred_fallthru
        _
      // Predicated region
      $region17: #{dense_detector_forward.1} parent=11 // pred_check
        %p211 = pneg %p95
      $region18: #{dense_detector_forward.1} parent=11 // pred_check_branch
        %213 = sbr.rel (%p211) target = $region20
      $region19: #{dense_detector_forward.1} parent=11 // pred_region
        _
      $region20: #{dense_detector_forward.1} parent=11 // pred_fallthru
        _
      // Predicated region
      $region21: #{dense_detector_forward.1} parent=11 // pred_check
        %p214 = pneg %p116
      $region22: #{dense_detector_forward.1} parent=11 // pred_check_branch
        %216 = sbr.rel (%p214) target = $region24
      $region23: #{dense_detector_forward.1} parent=11 // pred_region
        _
      $region24: #{dense_detector_forward.1} parent=11 // pred_fallthru
        _
      // Predicated region
      $region25: #{dense_detector_forward.1} parent=11 // pred_check
        %p217 = pneg %p137
      $region26: #{dense_detector_forward.1} parent=11 // pred_check_branch
        %219 = sbr.rel (%p217) target = $region28
      $region27: #{dense_detector_forward.1} parent=11 // pred_region
        _
      $region28: #{dense_detector_forward.1} parent=11 // pred_fallthru
        _
    $region12: #{dense_detector_forward.1} parent=5 // pred_fallthru
      _
    %p220 = scmp.lt.s32.totalorder %s13, 2
    // Predicated region
    $region29: #{dense_detector_forward.1} parent=5 // pred_check
      %p221 = pneg %p220
    $region30: #{dense_detector_forward.1} parent=5 // pred_check_branch
      %223 = sbr.rel (%p221) target = $region32
    $region31: #{dense_detector_forward.1} parent=5 // pred_region
      // Predicated region
      $region33: #{dense_detector_forward.1} parent=31 // pred_check
        %p224 = pneg %p47
      $region34: #{dense_detector_forward.1} parent=31 // pred_check_branch
        %226 = sbr.rel (%p224) target = $region36
      $region35: #{dense_detector_forward.1} parent=31 // pred_region
        %s227 = smul.u32 2, %s21
        %p228 = scmp.lt.s32.totalorder %s20, 1
        %s229 = scalar_select %p228, %s20, 1
        %p230 = scmp.lt.s32.totalorder %s227, 1
        %s231 = scalar_select %p230, %s227, 1
        %s232 = smul.addr %s229, 2
        %s233 = sadd.s32 %s231, %s232
        %s234 = smul.addr %s233, 4
        %s235 = scalar_lea.vmem %s0, %s234
        %s236 = smul.u32 2, %s21
      $region36: #{dense_detector_forward.1} parent=31 // pred_fallthru
        _
    $region32: #{dense_detector_forward.1} parent=5 // pred_fallthru
      _
    %p237 = scmp.le.s32.totalorder 1, %s13
    %p238 = scmp.lt.s32.totalorder %s13, 3
    %p239 = pnand %p237, %p238
    %p240 = pneg %p239
    // Predicated region
    $region37: #{dense_detector_forward.1} parent=5 // pred_check
      _
    $region38: #{dense_detector_forward.1} parent=5 // pred_check_branch
      %242 = sbr.rel (%p239) target = $region40
    $region39: #{dense_detector_forward.1} parent=5 // pred_region
      %s243 = ssub.s32 %s13, 1
      %s244 = smul.u32 2, %s23
      %p245 = scmp.lt.s32.totalorder %s22, 1
      %s246 = scalar_select %p245, %s22, 1
      %p247 = scmp.lt.s32.totalorder %s244, 1
      %s248 = scalar_select %p247, %s244, 1
      %s249 = smul.addr %s246, 2
      %s250 = sadd.s32 %s248, %s249
      %s251 = smul.addr %s250, 4
      %s252 = scalar_lea.vmem %s0, %s251
      %p253 = pneg %p53
      %p254 = pneg %p50
      %p255 = pneg %p74
      %p256 = pneg %p71
      %p257 = pneg %p95
      %p258 = pneg %p92
      %p259 = pneg %p116
      %p260 = pneg %p113
      %p261 = pneg %p137
      %p262 = pneg %p134
      %p263 = pneg %p165
      %p264 = pneg %p162
      %s265 = smul.u32 2, %s23
      %p266 = scmp.lt.s32.totalorder %s22, 1
      %s267 = scalar_select %p266, %s22, 1
      %p268 = scmp.lt.s32.totalorder %s265, 1
      %s269 = scalar_select %p268, %s265, 1
      %s270 = smul.addr %s267, 8
      %s271 = sadd.s32 %s269, %s270
      %s272 = smul.addr %s271, 4
      %s273 = scalar_lea.vmem %s5, %s272
      %p274 = pneg %p193
      %p275 = pneg %p190
      %s276 = smul.u32 2, %s23
      %p277 = scmp.lt.s32.totalorder %s22, 1
      %s278 = scalar_select %p277, %s22, 1
      %p279 = scmp.lt.s32.totalorder %s276, 1
      %s280 = scalar_select %p279, %s276, 1
      %s281 = smul.addr %s278, 6
      %s282 = sadd.s32 %s280, %s281
      %s283 = smul.addr %s282, 8
      %s284 = scalar_lea.vmem %s6, %s283
      %s285 = smul.u32 2, %s23
      %p286 = scmp.lt.s32.totalorder %s22, 1
      %s287 = scalar_select %p286, %s22, 1
      %p288 = scmp.lt.s32.totalorder %s285, 1
      %s289 = scalar_select %p288, %s285, 1
      %s290 = smul.addr %s287, 2
      %s291 = sadd.s32 %s289, %s290
      %s292 = smul.addr %s291, 4
      %s293 = scalar_lea.vmem %s0, %s292
      %s294 = smul.u32 2, %s23
      %s295 = smul.u32 2, %s23
      %p296 = scmp.lt.s32.totalorder %s22, 1
      %s297 = scalar_select %p296, %s22, 1
      %p298 = scmp.lt.s32.totalorder %s295, 1
      %s299 = scalar_select %p298, %s295, 1
      %s300 = smul.addr %s297, 8
      %s301 = sadd.s32 %s299, %s300
      %s302 = smul.addr %s301, 4
      %s303 = scalar_lea.vmem %s5, %s302
      %s304 = smul.u32 2, %s23
      %s305 = smul.u32 2, %s23
      %p306 = scmp.lt.s32.totalorder %s22, 1
      %s307 = scalar_select %p306, %s22, 1
      %p308 = scmp.lt.s32.totalorder %s305, 1
      %s309 = scalar_select %p308, %s305, 1
      %s310 = smul.addr %s307, 6
      %s311 = sadd.s32 %s309, %s310
      %s312 = smul.addr %s311, 8
      %s313 = scalar_lea.vmem %s6, %s312
      %s314 = smul.u32 2, %s23
      %v315 = vld [vmem:[%s293] sm:$0x77]
      %v316 = vld [vmem:[%s1] sm:$0xff]
      %v317 = vld [vmem:[%s1 + $0x8] sm:$0xff]
      %v318 = vld [vmem:[%s1 + $0x10] sm:$0xff]
      %v319 = vld [vmem:[%s1 + $0x18] sm:$0xff]
      %v320 = vld [vmem:[%s2] sm:$0xff]
      %v321 = vld [vmem:[%s2 + $0x8] sm:$0xff]
      %v322 = vld [vmem:[%s2 + $0x10] sm:$0xff]
      %v323 = vld [vmem:[%s2 + $0x18] sm:$0xff]
      %325 = vset.pattern.permute.xlu0 0
      %326 = vperm.xlu0 %325, %v320
      %v327 = vpop.permute.xlu0 %326
      %330 = vset.pattern.permute.xlu0 0
      %331 = vperm.xlu0 %330, %v321
      %v332 = vpop.permute.xlu0 %331
      %335 = vset.pattern.permute.xlu0 0
      %336 = vperm.xlu0 %335, %v322
      %v337 = vpop.permute.xlu0 %336
      %340 = vset.pattern.permute.xlu0 0
      %341 = vperm.xlu0 %340, %v323
      %v342 = vpop.permute.xlu0 %341
      %v345 = vcombine.high %v315, %v315
      %vm346 = vcmask 23552
      %v348 = vsel %vm346, %v316, 0
      %v351 = vsel %vm346, %v317, 0
      %v354 = vsel %vm346, %v318, 0
      %v357 = vsel %vm346, %v319, 0
      %vm359 = vcmask 1042432
      %v360 = vsel %vm359, %v315, 0
      %v362 = vsel %vm359, %v345, 0
      %364 = vmatprep.subr.mxu0 %v362
      %365 = vmatpush1.msra.mxu0 %v360
      %366 = vmatprep.subr.mxu0 0.0
      %367 = vmatpush1.msra.mxu0 0.0
      %368 = vmatprep.subr.mxu0 0.0
      %369 = vmatpush1.msra.mxu0 0.0
      %370 = vmatprep.subr.mxu0 0.0
      %371 = vmatpush1.msra.mxu0 0.0
      %372 = vmatprep.subr.mxu0 0.0
      %373 = vmatpush1.msra.mxu0 0.0
      %374 = vmatprep.subr.mxu0 0.0
      %375 = vmatpush1.msra.mxu0 0.0
      %376 = vmatprep.subr.mxu0 0.0
      %377 = vmatpush1.msra.mxu0 0.0
      %378 = vmatprep.subr.mxu0 0.0
      %379 = vmatpush1.msra.mxu0 0.0
      %380 = vmatprep.subr.mxu0 0.0
      %381 = vmatpush1.msra.mxu0 0.0
      %382 = vmatprep.subr.mxu0 0.0
      %383 = vmatpush1.msra.mxu0 0.0
      %384 = vmatprep.subr.mxu0 0.0
      %385 = vmatpush1.msra.mxu0 0.0
      %386 = vmatprep.subr.mxu0 0.0
      %387 = vmatpush1.msra.mxu0 0.0
      %388 = vmatprep.subr.mxu0 0.0
      %389 = vmatpush1.msra.mxu0 0.0
      %390 = vmatprep.subr.mxu0 0.0
      %391 = vmatpush1.msra.mxu0 0.0
      %392 = vmatprep.subr.mxu0 0.0
      %393 = vmatpush1.msra.mxu0 0.0
      %394 = vmatprep.subr.mxu0 0.0
      %395 = vmatpush1.msra.mxu0 0.0
      %396 = vmatprep.subr.mxu0 0.0
      %397 = vmatpush1.msra.mxu0 0.0
      %398 = vmatprep.subr.mxu0 0.0
      %399 = vmatpush1.msra.mxu0 0.0
      %400 = vmatprep.subr.mxu0 0.0
      %401 = vmatpush1.msra.mxu0 0.0
      %402 = vmatprep.subr.mxu0 0.0
      %403 = vmatpush1.msra.mxu0 0.0
      %404 = vmatprep.subr.mxu0 0.0
      %405 = vmatpush1.msra.mxu0 0.0
      %406 = vmatprep.subr.mxu0 0.0
      %407 = vmatpush1.msra.mxu0 0.0
      %408 = vmatprep.subr.mxu0 0.0
      %409 = vmatpush1.msra.mxu0 0.0
      %410 = vmatprep.subr.mxu0 0.0
      %411 = vmatpush1.msra.mxu0 0.0
      %412 = vmatprep.subr.mxu0 0.0
      %413 = vmatpush1.msra.mxu0 0.0
      %414 = vmatprep.subr.mxu0 0.0
      %415 = vmatpush1.msra.mxu0 0.0
      %416 = vmatprep.subr.mxu0 0.0
      %417 = vmatpush1.msra.mxu0 0.0
      %418 = vmatprep.subr.mxu0 0.0
      %419 = vmatpush1.msra.mxu0 0.0
      %420 = vmatprep.subr.mxu0 0.0
      %421 = vmatpush1.msra.mxu0 0.0
      %422 = vmatprep.subr.mxu0 0.0
      %423 = vmatpush1.msra.mxu0 0.0
      %424 = vmatprep.subr.mxu0 0.0
      %425 = vmatpush1.msra.mxu0 0.0
      %426 = vmatprep.subr.mxu0 0.0
      %427 = vmatpush1.msra.mxu0 0.0
      %428 = vmatprep.mubr.f32.mxu0 0.0
      %429 = vmatmul.mubr.f32.gmra.mrb[0].mxu0 %v348
      %v430 = vpop.f32.mrb[0].mxu0
      %v431 = vadd.f32 %v327, %v430
      %v432 = vpop.f32.mrb[0].mxu0
      %v433 = vadd.f32 %v327, %v432
      %434 = vmatprep.mubr.f32.mxu0 0.0
      %435 = vmatmul.mubr.f32.gmra.mrb[0].mxu0 %v351
      %v436 = vpop.f32.mrb[0].mxu0
      %v437 = vadd.f32 %v332, %v436
      %v438 = vpop.f32.mrb[0].mxu0
      %v439 = vadd.f32 %v332, %v438
      %440 = vmatprep.mubr.f32.mxu0 0.0
      %441 = vmatmul.mubr.f32.gmra.mrb[0].mxu0 %v354
      %v442 = vpop.f32.mrb[0].mxu0
      %v443 = vadd.f32 %v337, %v442
      %v444 = vpop.f32.mrb[0].mxu0
      %v445 = vadd.f32 %v337, %v444
      %446 = vmatprep.mubr.f32.mxu0 0.0
      %447 = vmatmul.mubr.f32.gmra.mrb[0].mxu0 %v357
      %v448 = vpop.f32.mrb[0].mxu0
      %v449 = vadd.f32 %v342, %v448
      %v450 = vpop.f32.mrb[0].mxu0
      %v451 = vadd.f32 %v342, %v450
      %452 = vdwg.mxu0
      %v453 = vmax.f32 %v431, 0.0
      %v454 = vmax.f32 %v433, 0.0
      %v455 = vmax.f32 %v437, 0.0
      %v456 = vmax.f32 %v439, 0.0
      %v457 = vmax.f32 %v443, 0.0
      %v458 = vmax.f32 %v445, 0.0
      %v459 = vmax.f32 %v449, 0.0
      %v460 = vmax.f32 %v451, 0.0
      %v461 = vld [vmem:[%s3] sm:$0xff]
      %v462 = vld [vmem:[%s3 + $0x8] sm:$0xff]
      %v463 = vld [vmem:[%s3 + $0x10] sm:$0xff]
      %v464 = vld [vmem:[%s4] sm:$0xff]
      %v465 = vld [vmem:[%s4 + $0x8] sm:$0xff]
      %v466 = vld [vmem:[%s4 + $0x10] sm:$0xff]
      %468 = vset.pattern.permute.xlu0 0
      %469 = vperm.xlu0 %468, %v464
      %v470 = vpop.permute.xlu0 %469
      %473 = vset.pattern.permute.xlu0 0
      %474 = vperm.xlu0 %473, %v465
      %v475 = vpop.permute.xlu0 %474
      %478 = vset.pattern.permute.xlu0 0
      %479 = vperm.xlu0 %478, %v466
      %v480 = vpop.permute.xlu0 %479
      %vm482 = vcmask 261120
      %v484 = vsel %vm482, %v461, 0
      %v487 = vsel %vm482, %v462, 0
      %v490 = vsel %vm482, %v463, 0
      %492 = vmatprep.subr.mxu0 %v454
      %493 = vmatpush1.msra.mxu0 %v453
      %494 = vmatprep.subr.mxu0 %v456
      %495 = vmatpush1.msra.mxu0 %v455
      %496 = vmatprep.subr.mxu0 %v458
      %497 = vmatpush1.msra.mxu0 %v457
      %498 = vmatprep.subr.mxu0 %v460
      %499 = vmatpush1.msra.mxu0 %v459
      %500 = vmatprep.subr.mxu0 0.0
      %501 = vmatpush1.msra.mxu0 0.0
      %502 = vmatprep.subr.mxu0 0.0
      %503 = vmatpush1.msra.mxu0 0.0
      %504 = vmatprep.subr.mxu0 0.0
      %505 = vmatpush1.msra.mxu0 0.0
      %506 = vmatprep.subr.mxu0 0.0
      %507 = vmatpush1.msra.mxu0 0.0
      %508 = vmatprep.subr.mxu0 0.0
      %509 = vmatpush1.msra.mxu0 0.0
      %510 = vmatprep.subr.mxu0 0.0
      %511 = vmatpush1.msra.mxu0 0.0
      %512 = vmatprep.subr.mxu0 0.0
      %513 = vmatpush1.msra.mxu0 0.0
      %514 = vmatprep.subr.mxu0 0.0
      %515 = vmatpush1.msra.mxu0 0.0
      %516 = vmatprep.subr.mxu0 0.0
      %517 = vmatpush1.msra.mxu0 0.0
      %518 = vmatprep.subr.mxu0 0.0
      %519 = vmatpush1.msra.mxu0 0.0
      %520 = vmatprep.subr.mxu0 0.0
      %521 = vmatpush1.msra.mxu0 0.0
      %522 = vmatprep.subr.mxu0 0.0
      %523 = vmatpush1.msra.mxu0 0.0
      %524 = vmatprep.subr.mxu0 0.0
      %525 = vmatpush1.msra.mxu0 0.0
      %526 = vmatprep.subr.mxu0 0.0
      %527 = vmatpush1.msra.mxu0 0.0
      %528 = vmatprep.subr.mxu0 0.0
      %529 = vmatpush1.msra.mxu0 0.0
      %530 = vmatprep.subr.mxu0 0.0
      %531 = vmatpush1.msra.mxu0 0.0
      %532 = vmatprep.subr.mxu0 0.0
      %533 = vmatpush1.msra.mxu0 0.0
      %534 = vmatprep.subr.mxu0 0.0
      %535 = vmatpush1.msra.mxu0 0.0
      %536 = vmatprep.subr.mxu0 0.0
      %537 = vmatpush1.msra.mxu0 0.0
      %538 = vmatprep.subr.mxu0 0.0
      %539 = vmatpush1.msra.mxu0 0.0
      %540 = vmatprep.subr.mxu0 0.0
      %541 = vmatpush1.msra.mxu0 0.0
      %542 = vmatprep.subr.mxu0 0.0
      %543 = vmatpush1.msra.mxu0 0.0
      %544 = vmatprep.subr.mxu0 0.0
      %545 = vmatpush1.msra.mxu0 0.0
      %546 = vmatprep.subr.mxu0 0.0
      %547 = vmatpush1.msra.mxu0 0.0
      %548 = vmatprep.subr.mxu0 0.0
      %549 = vmatpush1.msra.mxu0 0.0
      %550 = vmatprep.subr.mxu0 0.0
      %551 = vmatpush1.msra.mxu0 0.0
      %552 = vmatprep.subr.mxu0 0.0
      %553 = vmatpush1.msra.mxu0 0.0
      %554 = vmatprep.subr.mxu0 0.0
      %555 = vmatpush1.msra.mxu0 0.0
      %556 = vmatprep.mubr.f32.mxu0 0.0
      %557 = vmatmul.mubr.f32.gmra.mrb[0].mxu0 %v484
      %v558 = vpop.f32.mrb[0].mxu0
      %v559 = vadd.f32 %v470, %v558
      %v560 = vpop.f32.mrb[0].mxu0
      %v561 = vadd.f32 %v470, %v560
      %562 = vmatprep.mubr.f32.mxu0 0.0
      %563 = vmatmul.mubr.f32.gmra.mrb[0].mxu0 %v487
      %v564 = vpop.f32.mrb[0].mxu0
      %v565 = vadd.f32 %v475, %v564
      %v566 = vpop.f32.mrb[0].mxu0
      %v567 = vadd.f32 %v475, %v566
      %568 = vmatprep.mubr.f32.mxu0 0.0
      %569 = vmatmul.mubr.f32.gmra.mrb[0].mxu0 %v490
      %v570 = vpop.f32.mrb[0].mxu0
      %v571 = vadd.f32 %v480, %v570
      %v572 = vpop.f32.mrb[0].mxu0
      %v573 = vadd.f32 %v480, %v572
      %574 = vdwg.mxu0
      %v575 = vpack.c.bf16 %v455, %v453
      %v576 = vpack.c.bf16 %v456, %v454
      %v577 = vpack.c.bf16 %v459, %v457
      %v578 = vpack.c.bf16 %v460, %v458
      %v583 = vunpack.c.l.b16 %v575
      %v584 = vunpack.c.l.b16 %v576
      %v585 = vunpack.c.h.b16 %v575
      %v586 = vunpack.c.h.b16 %v576
      %v587 = vunpack.c.l.b16 %v577
      %v588 = vunpack.c.l.b16 %v578
      %v589 = vunpack.c.h.b16 %v577
      %v590 = vunpack.c.h.b16 %v578
      %v591 = vpack.c.b16 %v584, %v583
      %v592 = vpack.c.b16 %v586, %v585
      %v593 = vpack.c.b16 %v588, %v587
      %v594 = vpack.c.b16 %v590, %v589
      %599 = vst [vmem:[%s303] sm:$0xff] %v591
      %600 = vst [vmem:[%s303 + $0x8] sm:$0xff] %v592
      %601 = vst [vmem:[%s303 + $0x10] sm:$0xff] %v593
      %602 = vst [vmem:[%s303 + $0x18] sm:$0xff] %v594
      %603 = vst [vmem:[%s313] sm:$0xff] %v559
      %604 = vst [vmem:[%s313 + $0x8] sm:$0xff] %v561
      %605 = vst [vmem:[%s313 + $0x10] sm:$0xff] %v565
      %606 = vst [vmem:[%s313 + $0x18] sm:$0xff] %v567
      %607 = vst [vmem:[%s313 + $0x20] sm:$0xff] %v571
      %608 = vst [vmem:[%s313 + $0x28] sm:$0xff] %v573
      %s609 = smul.u32 2, %s23
      %p610 = scmp.lt.s32.totalorder %s22, 1
      %s611 = scalar_select %p610, %s22, 1
      %p612 = scmp.lt.s32.totalorder %s609, 1
      %s613 = scalar_select %p612, %s609, 1
      %s614 = smul.addr %s611, 8
      %s615 = sadd.s32 %s613, %s614
      %s616 = smul.addr %s615, 4
      %s617 = scalar_lea.vmem %s5, %s616
      %s618 = smul.u32 2, %s23
      %p619 = scmp.lt.s32.totalorder %s22, 1
      %s620 = scalar_select %p619, %s22, 1
      %p621 = scmp.lt.s32.totalorder %s618, 1
      %s622 = scalar_select %p621, %s618, 1
      %s623 = smul.addr %s620, 6
      %s624 = sadd.s32 %s622, %s623
      %s625 = smul.addr %s624, 8
      %s626 = scalar_lea.vmem %s6, %s625
      // Predicated region
      $region41: #{dense_detector_forward.1} parent=39 // pred_check
        %p627 = pneg %p162
      $region42: #{dense_detector_forward.1} parent=39 // pred_check_branch
        %629 = sbr.rel (%p627) target = $region44
      $region43: #{dense_detector_forward.1} parent=39 // pred_region
        %s630 = smul.u32 2, %s23
      $region44: #{dense_detector_forward.1} parent=39 // pred_fallthru
        _
      // Predicated region
      $region45: #{dense_detector_forward.1} parent=39 // pred_check
        %p631 = pneg %p190
      $region46: #{dense_detector_forward.1} parent=39 // pred_check_branch
        %633 = sbr.rel (%p631) target = $region48
      $region47: #{dense_detector_forward.1} parent=39 // pred_region
        %s634 = smul.u32 2, %s23
      $region48: #{dense_detector_forward.1} parent=39 // pred_fallthru
        _
    $region40: #{dense_detector_forward.1} parent=5 // pred_fallthru
      _
    %p635 = scmp.le.s32.totalorder 2, %s13
    // Predicated region
    $region49: #{dense_detector_forward.1} parent=5 // pred_check
      %p636 = pneg %p635
    $region50: #{dense_detector_forward.1} parent=5 // pred_check_branch
      %638 = sbr.rel (%p636) target = $region52
    $region51: #{dense_detector_forward.1} parent=5 // pred_region
      %s639 = ssub.s32 %s13, 2
      // Predicated region
      $region53: #{dense_detector_forward.1} parent=51 // pred_check
        %p640 = pneg %p168
      $region54: #{dense_detector_forward.1} parent=51 // pred_check_branch
        %642 = sbr.rel (%p640) target = $region56
      $region55: #{dense_detector_forward.1} parent=51 // pred_region
        %s643 = smul.u32 2, %s25
        %p644 = scmp.lt.s32.totalorder %s24, 1
        %s645 = scalar_select %p644, %s24, 1
        %p646 = scmp.lt.s32.totalorder %s643, 1
        %s647 = scalar_select %p646, %s643, 1
        %s648 = smul.addr %s645, 8
        %s649 = sadd.s32 %s647, %s648
        %s650 = smul.addr %s649, 4
        %s651 = scalar_lea.vmem %s5, %s650
      $region56: #{dense_detector_forward.1} parent=51 // pred_fallthru
        _
      // Predicated region
      $region57: #{dense_detector_forward.1} parent=51 // pred_check
        %p652 = pneg %p196
      $region58: #{dense_detector_forward.1} parent=51 // pred_check_branch
        %654 = sbr.rel (%p652) target = $region60
      $region59: #{dense_detector_forward.1} parent=51 // pred_region
        %s655 = smul.u32 2, %s25
        %p656 = scmp.lt.s32.totalorder %s24, 1
        %s657 = scalar_select %p656, %s24, 1
        %p658 = scmp.lt.s32.totalorder %s655, 1
        %s659 = scalar_select %p658, %s655, 1
        %s660 = smul.addr %s657, 6
        %s661 = sadd.s32 %s659, %s660
        %s662 = smul.addr %s661, 8
        %s663 = scalar_lea.vmem %s6, %s662
      $region60: #{dense_detector_forward.1} parent=51 // pred_fallthru
        _
    $region52: #{dense_detector_forward.1} parent=5 // pred_fallthru
      _
  $region6: #{dense_detector_forward.1} parent=0 // loop_footer
    %s17 = sadd.s32 1, %s13
  $region7: #{dense_detector_forward.1} parent=0 // loop_footer_branch
    %12 = sbr.rel target = $region3
  $region8: #{dense_detector_forward.1} parent=0 // loop_exit
    _

</llo_original>
